<compile_context>
chip_gen: v6e
topology: v6e:2x2x1
jax: 0.10.0
libtpu: 0.0.40
codegen_flags: <defaults>
</compile_context>

<pallas_src>
import jax
import jax.numpy as jnp
import numpy as np
from jax.experimental import pallas as pl
from jax.experimental.pallas import tpu as pltpu

K_BT = 1.0  # EnergyModel(k_BT=1.0) default


def energy_force_kernel(x_ref, w1_ref, w1t_ref, b1_ref, w2_ref, b2_ref,
                        e_ref, f_ref):
    """Forward energy + analytic force for one batch tile.

    x:   (TB, D)   flattened positions (ragged batch tail masked by Pallas)
    w1:  (D, Hp)   first-layer weights, H zero-padded to Hp (resident)
    w1t: (Hp, D)   pre-transposed w1 (resident)
    b1:  (1, Hp)   zero-padded bias (resident)
    w2:  (1, Hp)   second-layer weights as a row (resident)
    b2:  (1, 1)    scalar bias in SMEM
    e:   (TB, 1)   per-sample energy
    f:   (TB, D)   forces = -dE/dx
    """
    x = x_ref[...]                                     # (TB, D)
    w2_row = w2_ref[...]                               # (1, Hp)

    # forward: E_b = tanh(x_b @ W1 + b1) . w2 + b2
    z = jnp.dot(x, w1_ref[...], preferred_element_type=jnp.float32) + b1_ref[...]
    t = jnp.tanh(z)                                    # (TB, Hp)   (EUP)
    e = jnp.sum(t * w2_row, axis=-1, keepdims=True) + b2_ref[0, 0]  # (TB, 1)
    e_ref[...] = e.astype(e_ref.dtype)

    # backward (analytic grad of E.sum() wrt x), force = -grad:
    # dE/dx = ((1 - tanh^2(z)) * w2) @ W1^T
    g = (1.0 - t * t) * w2_row                         # (TB, Hp)   (VPU)
    f_ref[...] = (-jnp.dot(g, w1t_ref[...],
                           preferred_element_type=jnp.float32)).astype(f_ref.dtype)


def _round_up(x, m):
    return ((x + m - 1) // m) * m


def _choose_tb(B, D, Hp, tb):
    """Batch-tile rows: multiple of 8, >= 2 grid steps when B allows (v7x
    megacore sharding), and double-buffered streamed tiles within a VMEM
    budget that fits v5e's 16 MiB default scoped VMEM."""
    dp = _round_up(max(D, 1), 128)                     # physical lane padding
    per_row = 2 * 4 * (dp + dp + 128)                  # x + f + e, 2 buffers, f32
    weights = 2 * 4 * (_round_up(D, 8) * Hp + Hp * dp + 2 * 8 * Hp)
    budget = 12 * 1024 * 1024
    tb_vmem = max(8, ((budget - weights) // per_row) // 8 * 8)
    if B >= 16:
        tb_grid = _round_up(-(-B // 2), 8)             # guarantee >= 2 grid steps
    else:
        tb_grid = _round_up(B, 8)
    tb = max(8, (int(tb) // 8) * 8)
    return max(8, min(tb, tb_vmem, tb_grid))


def prepare_params(w1, b1, w2, b2):
    """One-time parameter prep: pad hidden dim to a multiple of 128 (exact
    zero padding) and pre-transpose w1.  Do this once at init, not per call."""
    D, H = w1.shape
    Hp = max(128, _round_up(H, 128))
    w1_p = jnp.zeros((D, Hp), jnp.float32).at[:, :H].set(jnp.asarray(w1, jnp.float32))
    w1t_p = w1_p.T                                     # (Hp, D), one-time transpose
    b1_p = jnp.zeros((1, Hp), jnp.float32).at[:, :H].set(
        jnp.asarray(b1, jnp.float32).reshape(1, H))
    w2_p = jnp.zeros((1, Hp), jnp.float32).at[:, :H].set(
        jnp.asarray(w2, jnp.float32).reshape(1, H))
    b2_p = jnp.asarray(b2, jnp.float32).reshape(1, 1)
    return w1_p, w1t_p, b1_p, w2_p, b2_p


def energy_force(pos, params, unit="kBT", k_BT=K_BT, tb=1024):
    """Mirrors EnergyModel.energy_force: returns (energy, forces)."""
    if unit not in ("kBT", "physical"):
        raise ValueError("`unit` should be either kBT or physical")
    w1_p, w1t_p, b1_p, w2_p, b2_p = params
    if unit == "physical":
        # fold k_BT into the tiny resident second-layer params instead of
        # rescaling the (B, N, 3) outputs (saves a full HBM pass over forces).
        w2_p = w2_p * k_BT
        b2_p = b2_p * k_BT

    B, N, C = pos.shape
    D = N * C
    Hp = w1_p.shape[1]

    x = pos.reshape(B, D).astype(jnp.float32)          # free reshape, no pad copy

    TB = _choose_tb(B, D, Hp, tb)
    grid = (pl.cdiv(B, TB),)

    e2d, f2d = pl.pallas_call(
        energy_force_kernel,
        grid=grid,
        out_shape=(jax.ShapeDtypeStruct((B, 1), jnp.float32),
                   jax.ShapeDtypeStruct((B, D), jnp.float32)),
        in_specs=[
            pl.BlockSpec((TB, D), lambda i: (i, 0)),            # x (streamed, ragged tail masked)
            pl.BlockSpec((D, Hp), lambda i: (0, 0)),            # w1 (resident)
            pl.BlockSpec((Hp, D), lambda i: (0, 0)),            # w1^T (resident)
            pl.BlockSpec((1, Hp), lambda i: (0, 0)),            # b1 (resident)
            pl.BlockSpec((1, Hp), lambda i: (0, 0)),            # w2 row (resident)
            pl.BlockSpec(memory_space=pltpu.MemorySpace.SMEM),  # b2 scalar
        ],
        out_specs=(pl.BlockSpec((TB, 1), lambda i: (i, 0)),     # energy (B, 1)
                   pl.BlockSpec((TB, D), lambda i: (i, 0))),    # forces (B, D)
        compiler_params=pltpu.CompilerParams(
            dimension_semantics=("parallel",),
            vmem_limit_bytes=32 * 1024 * 1024),
    )(x, w1_p, w1t_p, b1_p, w2_p, b2_p)

    energy = e2d.reshape(B)                            # free reshapes, no slices
    forces = f2d.reshape(B, N, C)
    return energy, forces


def force(pos, params, unit="kBT", k_BT=K_BT, tb=1024):
    return energy_force(pos, params, unit=unit, k_BT=k_BT, tb=tb)[1]


def energy(pos, params, unit="kBT", k_BT=K_BT, tb=1024):
    return energy_force(pos, params, unit=unit, k_BT=k_BT, tb=tb)[0]


# ---------------- pure-JAX reference (for correctness check) ----------------
def _energy_ref(x_flat, w1, b1, w2, b2):
    t = jnp.tanh(x_flat @ w1 + b1)
    return (t @ w2 + b2)[:, 0]


if __name__ == "__main__":
    # 20 samples, 10 coarse-grained beads, 3D coords, 32 hidden units.
    B, N, C, H = 20, 10, 3, 32
    D = N * C

    key = jax.random.PRNGKey(0)
    k_pos, k_w1, k_b1, k_w2, k_b2 = jax.random.split(key, 5)

    pos = jax.random.normal(k_pos, (B, N, C), dtype=jnp.float32)
    w1 = jax.random.normal(k_w1, (D, H), dtype=jnp.float32) * 0.1
    b1 = jax.random.normal(k_b1, (1, H), dtype=jnp.float32) * 0.1
    w2 = jax.random.normal(k_w2, (H, 1), dtype=jnp.float32) * 0.1
    b2 = jax.random.normal(k_b2, (1, 1), dtype=jnp.float32) * 0.1

    params = prepare_params(w1, b1, w2, b2)             # one-time weight prep

    # tb=8 exercises a 3-step batch grid with a ragged tail block (20 = 8+8+4).
    e, f = energy_force(pos, params, unit="kBT", tb=8)
    e = jax.block_until_ready(e)
    f = jax.block_until_ready(f)

    # reference via jax autograd (same semantics as torch.autograd.grad)
    x_flat = pos.reshape(B, D)
    e_ref = _energy_ref(x_flat, w1, b1, w2, b2)
    f_ref = -jax.grad(lambda x: _energy_ref(x, w1, b1, w2, b2).sum())(x_flat)
    f_ref = f_ref.reshape(B, N, C)

    assert e.shape == (B,) and f.shape == (B, N, C)
    np.testing.assert_allclose(np.asarray(e), np.asarray(e_ref), rtol=1e-5, atol=1e-5)
    np.testing.assert_allclose(np.asarray(f), np.asarray(f_ref), rtol=1e-5, atol=1e-5)

    # also exercise the default (large-tile, 2-step grid) path and the
    # physical-unit scaling folded into the resident weights.
    e2, f2 = energy_force(pos, params, unit="physical", k_BT=2.5)
    jax.block_until_ready(f2)
    np.testing.assert_allclose(np.asarray(e2), 2.5 * np.asarray(e_ref), rtol=1e-5, atol=1e-5)
    np.testing.assert_allclose(np.asarray(f2), 2.5 * np.asarray(f_ref), rtol=1e-5, atol=1e-5)

    print("KERNEL_OK")
</pallas_src>

<mosaic_0001>
module attributes {stable_mosaic.version = 11 : i64} {
  func.func @energy_force_kernel(%arg0: i32, %arg1: memref<8x30xf32, #tpu.memory_space<vmem>>, %arg2: memref<30x128xf32, #tpu.memory_space<vmem>>, %arg3: memref<128x30xf32, #tpu.memory_space<vmem>>, %arg4: memref<1x128xf32, #tpu.memory_space<vmem>>, %arg5: memref<1x128xf32, #tpu.memory_space<vmem>>, %arg6: memref<1x1xf32, #tpu.memory_space<smem>>, %arg7: memref<8x1xf32, #tpu.memory_space<vmem>>, %arg8: memref<8x30xf32, #tpu.memory_space<vmem>>) attributes {dimension_semantics = [#tpu.dimension_semantics<parallel>], iteration_bounds = array<i64: 3>, scalar_prefetch = 0 : i64, scratch_operands = 0 : i64, tpu.core_type = #tpu.core_type<tc>, window_params = [{transform_indices = @transform_0, window_bounds = array<i64: 8, 30>}, {pipeline_mode = #tpu.pipeline_mode<synchronous>, transform_indices = @transform_1, window_bounds = array<i64: 30, 128>}, {pipeline_mode = #tpu.pipeline_mode<synchronous>, transform_indices = @transform_2, window_bounds = array<i64: 128, 30>}, {pipeline_mode = #tpu.pipeline_mode<synchronous>, transform_indices = @transform_3, window_bounds = array<i64: 1, 128>}, {pipeline_mode = #tpu.pipeline_mode<synchronous>, transform_indices = @transform_4, window_bounds = array<i64: 1, 128>}, {transform_indices = @transform_5, window_bounds = array<i64: 1, 1>}, {transform_indices = @transform_6, window_bounds = array<i64: 8, 1>}, {transform_indices = @transform_7, window_bounds = array<i64: 8, 30>}]} {
    %c0 = arith.constant 0 : index
    %c0_0 = arith.constant 0 : index
    %0 = vector.load %arg1[%c0, %c0_0] : memref<8x30xf32, #tpu.memory_space<vmem>>, vector<8x30xf32>
    %c0_1 = arith.constant 0 : index
    %c0_2 = arith.constant 0 : index
    %1 = vector.load %arg5[%c0_1, %c0_2] : memref<1x128xf32, #tpu.memory_space<vmem>>, vector<1x128xf32>
    %c0_3 = arith.constant 0 : index
    %c0_4 = arith.constant 0 : index
    %2 = vector.load %arg2[%c0_3, %c0_4] : memref<30x128xf32, #tpu.memory_space<vmem>>, vector<30x128xf32>
    %cst = arith.constant dense<0.000000e+00> : vector<8x128xf32>
    %3 = tpu.matmul %0, %2, %cst {dimension_numbers = #tpu.dot_dimension_numbers<[1], [0], [0], [1], [0, 0, 1, 1], [], []>} : vector<8x30xf32>, vector<30x128xf32>, vector<8x128xf32> -> vector<8x128xf32>
    %c0_5 = arith.constant 0 : index
    %c0_6 = arith.constant 0 : index
    %4 = vector.load %arg4[%c0_5, %c0_6] : memref<1x128xf32, #tpu.memory_space<vmem>>, vector<1x128xf32>
    %5 = vector.broadcast %4 : vector<1x128xf32> to vector<8x128xf32>
    %6 = arith.addf %3, %5 : vector<8x128xf32>
    %7 = math.tanh %6 : vector<8x128xf32>
    %8 = vector.broadcast %1 : vector<1x128xf32> to vector<8x128xf32>
    %9 = arith.mulf %7, %8 : vector<8x128xf32>
    %cst_7 = arith.constant dense<0.000000e+00> : vector<8xf32>
    %10 = vector.multi_reduction <add>, %9, %cst_7 [1] : vector<8x128xf32> to vector<8xf32>
    %11 = vector.shape_cast %10 : vector<8xf32> to vector<8x1xf32>
    %c0_8 = arith.constant 0 : index
    %c0_9 = arith.constant 0 : index
    %12 = memref.load %arg6[%c0_8, %c0_9] : memref<1x1xf32, #tpu.memory_space<smem>>
    %13 = vector.broadcast %12 : f32 to vector<8x1xf32>
    %14 = arith.addf %11, %13 : vector<8x1xf32>
    %c0_10 = arith.constant 0 : index
    %c0_11 = arith.constant 0 : index
    %15 = vector.load %arg7[%c0_10, %c0_11] : memref<8x1xf32, #tpu.memory_space<vmem>>, vector<8x1xf32>
    tpu.vector_store %arg7[%c0_10, %c0_11], %14 {strides = array<i32>} : memref<8x1xf32, #tpu.memory_space<vmem>>, vector<8x1xf32>,
    %16 = arith.mulf %7, %7 : vector<8x128xf32>
    %cst_12 = arith.constant 1.000000e+00 : f32
    %17 = vector.broadcast %cst_12 : f32 to vector<8x128xf32>
    %18 = arith.subf %17, %16 : vector<8x128xf32>
    %19 = vector.broadcast %1 : vector<1x128xf32> to vector<8x128xf32>
    %20 = arith.mulf %18, %19 : vector<8x128xf32>
    %c0_13 = arith.constant 0 : index
    %c0_14 = arith.constant 0 : index
    %21 = vector.load %arg3[%c0_13, %c0_14] : memref<128x30xf32, #tpu.memory_space<vmem>>, vector<128x30xf32>
    %cst_15 = arith.constant dense<0.000000e+00> : vector<8x30xf32>
    %22 = tpu.matmul %20, %21, %cst_15 {dimension_numbers = #tpu.dot_dimension_numbers<[1], [0], [0], [1], [0, 0, 1, 1], [], []>} : vector<8x128xf32>, vector<128x30xf32>, vector<8x30xf32> -> vector<8x30xf32>
    %cst_16 = arith.constant 0.000000e+00 : f32
    %23 = vector.broadcast %cst_16 : f32 to vector<8x30xf32>
    %24 = arith.subf %23, %22 : vector<8x30xf32>
    %c0_17 = arith.constant 0 : index
    %c0_18 = arith.constant 0 : index
    %25 = vector.load %arg8[%c0_17, %c0_18] : memref<8x30xf32, #tpu.memory_space<vmem>>, vector<8x30xf32>
    tpu.vector_store %arg8[%c0_17, %c0_18], %24 {strides = array<i32>} : memref<8x30xf32, #tpu.memory_space<vmem>>, vector<8x30xf32>,
    return
  }
  func.func @transform_0(%arg0: i32) -> (i32, i32) {
    %c0_i32 = arith.constant 0 : i32
    %c0_i32_0 = arith.constant 0 : i32
    return %arg0, %c0_i32 : i32, i32
  }
  func.func @transform_1(%arg0: i32) -> (i32, i32) {
    %c0_i32 = arith.constant 0 : i32
    %c0_i32_0 = arith.constant 0 : i32
    %c0_i32_1 = arith.constant 0 : i32
    return %c0_i32, %c0_i32_0 : i32, i32
  }
  func.func @transform_2(%arg0: i32) -> (i32, i32) {
    %c0_i32 = arith.constant 0 : i32
    %c0_i32_0 = arith.constant 0 : i32
    %c0_i32_1 = arith.constant 0 : i32
    return %c0_i32, %c0_i32_0 : i32, i32
  }
  func.func @transform_3(%arg0: i32) -> (i32, i32) {
    %c0_i32 = arith.constant 0 : i32
    %c0_i32_0 = arith.constant 0 : i32
    %c0_i32_1 = arith.constant 0 : i32
    return %c0_i32, %c0_i32_0 : i32, i32
  }
  func.func @transform_4(%arg0: i32) -> (i32, i32) {
    %c0_i32 = arith.constant 0 : i32
    %c0_i32_0 = arith.constant 0 : i32
    %c0_i32_1 = arith.constant 0 : i32
    return %c0_i32, %c0_i32_0 : i32, i32
  }
  func.func @transform_5(%arg0: i32) -> (i32, i32) {
    %c0_i32 = arith.constant 0 : i32
    %c0_i32_0 = arith.constant 0 : i32
    %c0_i32_1 = arith.constant 0 : i32
    return %c0_i32, %c0_i32_0 : i32, i32
  }
  func.func @transform_6(%arg0: i32) -> (i32, i32) {
    %c0_i32 = arith.constant 0 : i32
    %c0_i32_0 = arith.constant 0 : i32
    return %arg0, %c0_i32 : i32, i32
  }
  func.func @transform_7(%arg0: i32) -> (i32, i32) {
    %c0_i32 = arith.constant 0 : i32
    %c0_i32_0 = arith.constant 0 : i32
    return %arg0, %c0_i32 : i32, i32
  }
}

</mosaic_0001>

<llo_original>
// kernel: tpu_custom_call.1
$region0: #{tpu_custom_call.1}
  #allocation0 [shape = 'u32[]', space=smem, size = 0x4, offset = 0x4, fixed_abs, tag = 'smem constant byte address 0x4 - core index']
  #allocation1 [shape = 'u32[144,128]{1,0:T(1,128)}', space=vmem, size = 0x12000, scoped, tag = 'internal scratch']
  #allocation2 [shape = 'f32[1,1]{1,0:T(1,128)S(6)}', space=smem, size = 0x200, scoped, tag = 'scoped memory for tpu_custom_call.1']
  %s0 = inlined_call_operand.vmem [shape: f32[20,30], index: 0, kind: input, shape index: {}]
  %s1 = inlined_call_operand.vmem [shape: f32[30,128], index: 1, kind: input, shape index: {}]
  %s2 = inlined_call_operand.vmem [shape: f32[128,30], index: 2, kind: input, shape index: {}]
  %s3 = inlined_call_operand.vmem [shape: f32[1,128], index: 3, kind: input, shape index: {}]
  %s4 = inlined_call_operand.vmem [shape: f32[1,128], index: 4, kind: input, shape index: {}]
  %s5 = inlined_call_operand.<no memory space> [shape: f32[1,1], index: 5, kind: input, shape index: {}]
  %s6 = inlined_call_operand.vmem [shape: f32[20,1], index: 6, kind: output, shape index: {0}]
  %s7 = inlined_call_operand.hbm [shape: f32[20,30], index: 7, kind: output, shape index: {1}]
  %8 = xla_tuple %s6, %s7
  %s9 = sld [smem:[#allocation0]]
  $region65: #{tpu_custom_call.1} parent=0
    _
  %s11 = ssub.s32 1, %s9
  %s12 = scalar_select 0, %s11, %s9
  %13 = sst [smem:[#allocation2]] %s5
  $region1: #{tpu_custom_call.1} parent=0
    #allocation3 [shape = 'u8[8192]{0}', space=vmem, size = 0x2000, scoped, tag = 'output window, operand 1']
    #allocation4 [shape = 's32[2]{0}', space=sflag, size = 0x8, scoped, tag = 'scoped memory for tpu_custom_call.1']
    %14 = vsyncpa [#allocation4], 0
    %s15 = scalar_lea.sflag [#allocation4], 1
    %16 = vsyncpa %s15, 0
    loop: start=0, step=1, limit=5
    $region2: #{tpu_custom_call.1} parent=1 // loop_pre_header
      _
    $region3: #{tpu_custom_call.1} parent=1 // loop_header
      %s18 = sphi 0, %s22
      %p19 = scmp.ge.s32.totalorder %s18, 5
      %s28 = sphi 0, %s30
      %s31 = sphi 0, %s28
      %s32 = sphi 0, %s31
      %s48 = sphi 0, %s32
      %s52 = sphi 0, %s52
      %s54 = sphi 0, %s52
      %s55 = sphi 0, %s54
      %s69 = sphi 0, %s55
      %s73 = sphi 0, %s73
      %s75 = sphi 0, %s73
      %s76 = sphi 0, %s75
      %s90 = sphi 0, %s76
      %s94 = sphi 0, %s94
      %s96 = sphi 0, %s94
      %s97 = sphi 0, %s96
      %s111 = sphi 0, %s97
      %s115 = sphi 0, %s115
      %s117 = sphi 0, %s115
      %s118 = sphi 0, %s117
      %s132 = sphi 0, %s118
      %s136 = sphi 0, %s136
      %s138 = sphi 0, %s136
      %s139 = sphi 0, %s138
      %s153 = sphi 0, %s139
      %s159 = sphi 0, %s161
      %s162 = sphi 0, %s159
      %s163 = sphi 0, %s162
      %s179 = sphi 0, %s163
      %s185 = sphi 0, %s187
      %s188 = sphi 0, %s185
      %s189 = sphi 0, %s188
      %s205 = sphi 0, %s189
    $region4: #{tpu_custom_call.1} parent=1 // loop_header_branch
      %21 = sbr.rel (%p19) target = $region8
    $region5: #{tpu_custom_call.1} parent=1 // loop_body
      %s23 = ssub.s32 %s18, 1
      %s24 = ssub.s32 %s18, 2
      %s25 = sadd.s32 %s18, 1
      %s26 = ssub.s32 %s18, %s25
      %p27 = scmp.eq.s32.totalorder %s26, 0
      %s29 = sadd.s32 %s28, 1
      %s30 = scalar_select %p27, %s28, %s29
      %p33 = pneg %p27
      %p34 = scmp.eq.s32.totalorder %s18, 2
      %p35 = por %p33, %p34
      %p36 = scmp.ne.s32.totalorder %s28, %s31
      %p37 = scmp.eq.s32.totalorder %s18, 0
      %p38 = por %p36, %p37
      %p39 = scmp.ne.s32.totalorder %s28, %s31
      %p40 = scmp.eq.s32.totalorder %s23, 2
      %p41 = por %p39, %p40
      %p42 = scmp.ne.s32.totalorder %s31, %s32
      %p43 = scmp.eq.s32.totalorder %s23, 0
      %p44 = por %p42, %p43
      %p45 = scmp.ne.s32.totalorder %s31, %s32
      %p46 = scmp.eq.s32.totalorder %s24, 2
      %p47 = por %p45, %p46
      %p49 = scmp.ne.s32.totalorder %s32, %s48
      %p50 = scmp.eq.s32.totalorder %s24, 0
      %p51 = por %p49, %p50
      %s53 = sadd.s32 %s52, 1
      %p56 = scmp.eq.s32.totalorder %s18, 2
      %p57 = scmp.ne.s32.totalorder %s52, %s54
      %p58 = scmp.eq.s32.totalorder %s18, 0
      %p59 = por %p57, %p58
      %p60 = scmp.ne.s32.totalorder %s52, %s54
      %p61 = scmp.eq.s32.totalorder %s23, 2
      %p62 = por %p60, %p61
      %p63 = scmp.ne.s32.totalorder %s54, %s55
      %p64 = scmp.eq.s32.totalorder %s23, 0
      %p65 = por %p63, %p64
      %p66 = scmp.ne.s32.totalorder %s54, %s55
      %p67 = scmp.eq.s32.totalorder %s24, 2
      %p68 = por %p66, %p67
      %p70 = scmp.ne.s32.totalorder %s55, %s69
      %p71 = scmp.eq.s32.totalorder %s24, 0
      %p72 = por %p70, %p71
      %s74 = sadd.s32 %s73, 1
      %p77 = scmp.eq.s32.totalorder %s18, 2
      %p78 = scmp.ne.s32.totalorder %s73, %s75
      %p79 = scmp.eq.s32.totalorder %s18, 0
      %p80 = por %p78, %p79
      %p81 = scmp.ne.s32.totalorder %s73, %s75
      %p82 = scmp.eq.s32.totalorder %s23, 2
      %p83 = por %p81, %p82
      %p84 = scmp.ne.s32.totalorder %s75, %s76
      %p85 = scmp.eq.s32.totalorder %s23, 0
      %p86 = por %p84, %p85
      %p87 = scmp.ne.s32.totalorder %s75, %s76
      %p88 = scmp.eq.s32.totalorder %s24, 2
      %p89 = por %p87, %p88
      %p91 = scmp.ne.s32.totalorder %s76, %s90
      %p92 = scmp.eq.s32.totalorder %s24, 0
      %p93 = por %p91, %p92
      %s95 = sadd.s32 %s94, 1
      %p98 = scmp.eq.s32.totalorder %s18, 2
      %p99 = scmp.ne.s32.totalorder %s94, %s96
      %p100 = scmp.eq.s32.totalorder %s18, 0
      %p101 = por %p99, %p100
      %p102 = scmp.ne.s32.totalorder %s94, %s96
      %p103 = scmp.eq.s32.totalorder %s23, 2
      %p104 = por %p102, %p103
      %p105 = scmp.ne.s32.totalorder %s96, %s97
      %p106 = scmp.eq.s32.totalorder %s23, 0
      %p107 = por %p105, %p106
      %p108 = scmp.ne.s32.totalorder %s96, %s97
      %p109 = scmp.eq.s32.totalorder %s24, 2
      %p110 = por %p108, %p109
      %p112 = scmp.ne.s32.totalorder %s97, %s111
      %p113 = scmp.eq.s32.totalorder %s24, 0
      %p114 = por %p112, %p113
      %s116 = sadd.s32 %s115, 1
      %p119 = scmp.eq.s32.totalorder %s18, 2
      %p120 = scmp.ne.s32.totalorder %s115, %s117
      %p121 = scmp.eq.s32.totalorder %s18, 0
      %p122 = por %p120, %p121
      %p123 = scmp.ne.s32.totalorder %s115, %s117
      %p124 = scmp.eq.s32.totalorder %s23, 2
      %p125 = por %p123, %p124
      %p126 = scmp.ne.s32.totalorder %s117, %s118
      %p127 = scmp.eq.s32.totalorder %s23, 0
      %p128 = por %p126, %p127
      %p129 = scmp.ne.s32.totalorder %s117, %s118
      %p130 = scmp.eq.s32.totalorder %s24, 2
      %p131 = por %p129, %p130
      %p133 = scmp.ne.s32.totalorder %s118, %s132
      %p134 = scmp.eq.s32.totalorder %s24, 0
      %p135 = por %p133, %p134
      %s137 = sadd.s32 %s136, 1
      %p140 = scmp.eq.s32.totalorder %s18, 2
      %p141 = scmp.ne.s32.totalorder %s136, %s138
      %p142 = scmp.eq.s32.totalorder %s18, 0
      %p143 = por %p141, %p142
      %p144 = scmp.ne.s32.totalorder %s136, %s138
      %p145 = scmp.eq.s32.totalorder %s23, 2
      %p146 = por %p144, %p145
      %p147 = scmp.ne.s32.totalorder %s138, %s139
      %p148 = scmp.eq.s32.totalorder %s23, 0
      %p149 = por %p147, %p148
      %p150 = scmp.ne.s32.totalorder %s138, %s139
      %p151 = scmp.eq.s32.totalorder %s24, 2
      %p152 = por %p150, %p151
      %p154 = scmp.ne.s32.totalorder %s139, %s153
      %p155 = scmp.eq.s32.totalorder %s24, 0
      %p156 = por %p154, %p155
      %s157 = ssub.s32 %s18, %s25
      %p158 = scmp.eq.s32.totalorder %s157, 0
      %s160 = sadd.s32 %s159, 1
      %s161 = scalar_select %p158, %s159, %s160
      %p164 = pneg %p158
      %p165 = scmp.eq.s32.totalorder %s18, 2
      %p166 = por %p164, %p165
      %p167 = scmp.ne.s32.totalorder %s159, %s162
      %p168 = scmp.eq.s32.totalorder %s18, 0
      %p169 = por %p167, %p168
      %p170 = scmp.ne.s32.totalorder %s159, %s162
      %p171 = scmp.eq.s32.totalorder %s23, 2
      %p172 = por %p170, %p171
      %p173 = scmp.ne.s32.totalorder %s162, %s163
      %p174 = scmp.eq.s32.totalorder %s23, 0
      %p175 = por %p173, %p174
      %p176 = scmp.ne.s32.totalorder %s162, %s163
      %p177 = scmp.eq.s32.totalorder %s24, 2
      %p178 = por %p176, %p177
      %p180 = scmp.ne.s32.totalorder %s163, %s179
      %p181 = scmp.eq.s32.totalorder %s24, 0
      %p182 = por %p180, %p181
      %s183 = ssub.s32 %s18, %s25
      %p184 = scmp.eq.s32.totalorder %s183, 0
      %s186 = sadd.s32 %s185, 1
      %s187 = scalar_select %p184, %s185, %s186
      %p190 = pneg %p184
      %p191 = scmp.eq.s32.totalorder %s18, 2
      %p192 = por %p190, %p191
      %p193 = scmp.ne.s32.totalorder %s185, %s188
      %p194 = scmp.eq.s32.totalorder %s18, 0
      %p195 = por %p193, %p194
      %p196 = scmp.ne.s32.totalorder %s185, %s188
      %p197 = scmp.eq.s32.totalorder %s23, 2
      %p198 = por %p196, %p197
      %p199 = scmp.ne.s32.totalorder %s188, %s189
      %p200 = scmp.eq.s32.totalorder %s23, 0
      %p201 = por %p199, %p200
      %p202 = scmp.ne.s32.totalorder %s188, %s189
      %p203 = scmp.eq.s32.totalorder %s24, 2
      %p204 = por %p202, %p203
      %p206 = scmp.ne.s32.totalorder %s189, %s205
      %p207 = scmp.eq.s32.totalorder %s24, 0
      %p208 = por %p206, %p207
      %p209 = scmp.le.s32.totalorder 1, %s18
      %p210 = scmp.lt.s32.totalorder %s18, 4
      %p211 = pnand %p209, %p210
      %p212 = pneg %p211
      // Predicated region
      $region9: #{tpu_custom_call.1} parent=5 // pred_check
        _
      $region10: #{tpu_custom_call.1} parent=5 // pred_check_branch
        %214 = sbr.rel (%p211) target = $region12
      $region11: #{tpu_custom_call.1} parent=5 // pred_region
        %s215 = ssub.s32 %s18, 1
        // Predicated region
        $region13: #{tpu_custom_call.1} parent=11 // pred_check
          %p216 = pneg %p65
        $region14: #{tpu_custom_call.1} parent=11 // pred_check_branch
          %218 = sbr.rel (%p216) target = $region16
        $region15: #{tpu_custom_call.1} parent=11 // pred_region
          _
        $region16: #{tpu_custom_call.1} parent=11 // pred_fallthru
          _
        // Predicated region
        $region17: #{tpu_custom_call.1} parent=11 // pred_check
          %p219 = pneg %p86
        $region18: #{tpu_custom_call.1} parent=11 // pred_check_branch
          %221 = sbr.rel (%p219) target = $region20
        $region19: #{tpu_custom_call.1} parent=11 // pred_region
          _
        $region20: #{tpu_custom_call.1} parent=11 // pred_fallthru
          _
        // Predicated region
        $region21: #{tpu_custom_call.1} parent=11 // pred_check
          %p222 = pneg %p107
        $region22: #{tpu_custom_call.1} parent=11 // pred_check_branch
          %224 = sbr.rel (%p222) target = $region24
        $region23: #{tpu_custom_call.1} parent=11 // pred_region
          _
        $region24: #{tpu_custom_call.1} parent=11 // pred_fallthru
          _
        // Predicated region
        $region25: #{tpu_custom_call.1} parent=11 // pred_check
          %p225 = pneg %p128
        $region26: #{tpu_custom_call.1} parent=11 // pred_check_branch
          %227 = sbr.rel (%p225) target = $region28
        $region27: #{tpu_custom_call.1} parent=11 // pred_region
          _
        $region28: #{tpu_custom_call.1} parent=11 // pred_fallthru
          _
        // Predicated region
        $region29: #{tpu_custom_call.1} parent=11 // pred_check
          %p228 = pneg %p149
        $region30: #{tpu_custom_call.1} parent=11 // pred_check_branch
          %230 = sbr.rel (%p228) target = $region32
        $region31: #{tpu_custom_call.1} parent=11 // pred_region
          _
        $region32: #{tpu_custom_call.1} parent=11 // pred_fallthru
          _
      $region12: #{tpu_custom_call.1} parent=5 // pred_fallthru
        _
      %p231 = scmp.lt.s32.totalorder %s18, 3
      // Predicated region
      $region33: #{tpu_custom_call.1} parent=5 // pred_check
        %p232 = pneg %p231
      $region34: #{tpu_custom_call.1} parent=5 // pred_check_branch
        %234 = sbr.rel (%p232) target = $region36
      $region35: #{tpu_custom_call.1} parent=5 // pred_region
        // Predicated region
        $region37: #{tpu_custom_call.1} parent=35 // pred_check
          %p235 = pneg %p38
        $region38: #{tpu_custom_call.1} parent=35 // pred_check_branch
          %237 = sbr.rel (%p235) target = $region40
        $region39: #{tpu_custom_call.1} parent=35 // pred_region
          %p238 = scmp.lt.s32.totalorder %s18, 2
          %s239 = scalar_select %p238, %s18, 2
          %s240 = smul.addr %s239, 8
          %s241 = scalar_lea.vmem %s0, %s240
        $region40: #{tpu_custom_call.1} parent=35 // pred_fallthru
          _
      $region36: #{tpu_custom_call.1} parent=5 // pred_fallthru
        _
      %p242 = scmp.le.s32.totalorder 1, %s18
      %p243 = scmp.lt.s32.totalorder %s18, 4
      %p244 = pnand %p242, %p243
      %p245 = pneg %p244
      // Predicated region
      $region41: #{tpu_custom_call.1} parent=5 // pred_check
        _
      $region42: #{tpu_custom_call.1} parent=5 // pred_check_branch
        %247 = sbr.rel (%p244) target = $region44
      $region43: #{tpu_custom_call.1} parent=5 // pred_region
        %s248 = ssub.s32 %s18, 1
        %p249 = scmp.lt.s32.totalorder %s23, 2
        %s250 = scalar_select %p249, %s23, 2
        %s251 = smul.addr %s250, 8
        %s252 = scalar_lea.vmem %s0, %s251
        %p253 = pneg %p44
        %p254 = pneg %p41
        %p255 = pneg %p65
        %p256 = pneg %p62
        %p257 = pneg %p86
        %p258 = pneg %p83
        %p259 = pneg %p107
        %p260 = pneg %p104
        %p261 = pneg %p128
        %p262 = pneg %p125
        %p263 = pneg %p149
        %p264 = pneg %p146
        %p265 = pneg %p175
        %p266 = pneg %p172
        %p267 = scmp.lt.s32.totalorder %s23, 2
        %s268 = scalar_select %p267, %s23, 2
        %s269 = smul.addr %s268, 8
        %s270 = scalar_lea.vmem %s6, %s269
        %p271 = pneg %p201
        %p272 = pneg %p198
        %s273 = sand.u32 %s188, 1
        %s274 = scalar_lea.sflag [#allocation4], %s273
        %s275 = sand.u32 %s188, 1
        %s276 = smul.addr %s275, 8
        %s277 = scalar_lea.vmem [#allocation3], %s276
        %p278 = scmp.lt.s32.totalorder %s23, 2
        %s279 = scalar_select %p278, %s23, 2
        %s280 = smul.addr %s279, 8
        %s281 = scalar_lea.vmem %s0, %s280
        %p282 = scmp.lt.s32.totalorder %s23, 2
        %s283 = scalar_select %p282, %s23, 2
        %s284 = smul.addr %s283, 8
        %s285 = scalar_lea.vmem %s6, %s284
        %v286 = vld [vmem:[%s281] sm:$0xff]
        %v287 = vld [vmem:[%s4] sm:$0x1]
        %v288 = vld [vmem:[%s1] sm:$0xff]
        %v289 = vld [vmem:[%s1 + $0x8] sm:$0xff]
        %v290 = vld [vmem:[%s1 + $0x10] sm:$0xff]
        %v291 = vld [vmem:[%s1 + $0x18] sm:$0x3f]
        %v292 = vld [vmem:[%s3] sm:$0x1]
        %v294 = vlaneseq
        %v295 = vshrl.u32 %v294, 7
        %v296 = vsub.s32 0, %v295
        %v297 = vrot.slane %v292, %v296
        %vm299 = vcmask 244736
        %v301 = vsel %vm299, %v286, 0
        %vm303 = vcmask 1045504
        %v305 = vsel %vm303, %v291, 0
        %307 = vmatprep.subr.mxu0 0.0
        %308 = vmatpush1.msra.mxu0 0.0
        %309 = vmatprep.subr.mxu0 0.0
        %310 = vmatpush1.msra.mxu0 0.0
        %311 = vmatprep.subr.mxu0 0.0
        %312 = vmatpush1.msra.mxu0 0.0
        %313 = vmatprep.subr.mxu0 0.0
        %314 = vmatpush1.msra.mxu0 0.0
        %315 = vmatprep.subr.mxu0 0.0
        %316 = vmatpush1.msra.mxu0 0.0
        %317 = vmatprep.subr.mxu0 0.0
        %318 = vmatpush1.msra.mxu0 0.0
        %319 = vmatprep.subr.mxu0 0.0
        %320 = vmatpush1.msra.mxu0 0.0
        %321 = vmatprep.subr.mxu0 0.0
        %322 = vmatpush1.msra.mxu0 0.0
        %323 = vmatprep.subr.mxu0 0.0
        %324 = vmatpush1.msra.mxu0 0.0
        %325 = vmatprep.subr.mxu0 0.0
        %326 = vmatpush1.msra.mxu0 0.0
        %327 = vmatprep.subr.mxu0 0.0
        %328 = vmatpush1.msra.mxu0 0.0
        %329 = vmatprep.subr.mxu0 0.0
        %330 = vmatpush1.msra.mxu0 0.0
        %331 = vmatprep.subr.mxu0 0.0
        %332 = vmatpush1.msra.mxu0 %v305
        %333 = vmatprep.subr.mxu0 0.0
        %334 = vmatpush1.msra.mxu0 %v290
        %335 = vmatprep.subr.mxu0 0.0
        %336 = vmatpush1.msra.mxu0 %v289
        %337 = vmatprep.subr.mxu0 0.0
        %338 = vmatpush1.msra.mxu0 %v288
        %339 = vmatprep.subr.mxu0 0.0
        %340 = vmatpush2.msra.mxu0 0.0
        %341 = vmatprep.subr.mxu0 0.0
        %342 = vmatpush2.msra.mxu0 0.0
        %343 = vmatprep.subr.mxu0 0.0
        %344 = vmatpush2.msra.mxu0 0.0
        %345 = vmatprep.subr.mxu0 0.0
        %346 = vmatpush2.msra.mxu0 0.0
        %347 = vmatprep.subr.mxu0 0.0
        %348 = vmatpush2.msra.mxu0 0.0
        %349 = vmatprep.subr.mxu0 0.0
        %350 = vmatpush2.msra.mxu0 0.0
        %351 = vmatprep.subr.mxu0 0.0
        %352 = vmatpush2.msra.mxu0 0.0
        %353 = vmatprep.subr.mxu0 0.0
        %354 = vmatpush2.msra.mxu0 0.0
        %355 = vmatprep.subr.mxu0 0.0
        %356 = vmatpush2.msra.mxu0 0.0
        %357 = vmatprep.subr.mxu0 0.0
        %358 = vmatpush2.msra.mxu0 0.0
        %359 = vmatprep.subr.mxu0 0.0
        %360 = vmatpush2.msra.mxu0 0.0
        %361 = vmatprep.subr.mxu0 0.0
        %362 = vmatpush2.msra.mxu0 0.0
        %363 = vmatprep.subr.mxu0 0.0
        %364 = vmatpush2.msra.mxu0 0.0
        %365 = vmatprep.subr.mxu0 0.0
        %366 = vmatpush2.msra.mxu0 0.0
        %367 = vmatprep.subr.mxu0 0.0
        %368 = vmatpush2.msra.mxu0 0.0
        %369 = vmatprep.subr.mxu0 0.0
        %370 = vmatpush2.msra.mxu0 0.0
        %371 = vmatprep.mubr.f32.mxu0 0.0
        %372 = vmatmul.mubr.f32.gmra.mxu0 %v301
        %v373 = vpop.f32.mrf.mxu0
        %v374 = vadd.f32 %v297, %v373
        %v375 = vpop.f32.mrf.mxu0
        %376 = vdwg.mxu0
        %v377 = vtanh.pop %v374
        %v379 = vlaneseq
        %v380 = vshrl.u32 %v379, 7
        %v381 = vsub.s32 0, %v380
        %v382 = vrot.slane %v287, %v381
        %v384 = vmul.f32 %v377, %v382
        %385 = vadd.xlane.f32.xlu0 %v384
        %v386 = vpop.xlane.xlu0 %385
        %s387 = sld [smem:[#allocation2]]
        %v388 = vstv %s387
        %v389 = vadd.f32 %v386, %v388
        %vm390 = vcmask 7168
        %391 = vst.msk [vmem:[%s285] sm:$0xff] %vm390, %v389
        %v392 = vmul.f32 %v377, %v377
        %v393 = vsub.f32 1.0, %v392
        %v394 = vmul.f32 %v393, %v382
        %v395 = vld [vmem:[%s2] sm:$0xff]
        %v396 = vld [vmem:[%s2 + $0x8] sm:$0xff]
        %v397 = vld [vmem:[%s2 + $0x10] sm:$0xff]
        %v398 = vld [vmem:[%s2 + $0x18] sm:$0xff]
        %v399 = vld [vmem:[%s2 + $0x20] sm:$0xff]
        %v400 = vld [vmem:[%s2 + $0x28] sm:$0xff]
        %v401 = vld [vmem:[%s2 + $0x30] sm:$0xff]
        %v402 = vld [vmem:[%s2 + $0x38] sm:$0xff]
        %v403 = vld [vmem:[%s2 + $0x40] sm:$0xff]
        %v404 = vld [vmem:[%s2 + $0x48] sm:$0xff]
        %v405 = vld [vmem:[%s2 + $0x50] sm:$0xff]
        %v406 = vld [vmem:[%s2 + $0x58] sm:$0xff]
        %v407 = vld [vmem:[%s2 + $0x60] sm:$0xff]
        %v408 = vld [vmem:[%s2 + $0x68] sm:$0xff]
        %v409 = vld [vmem:[%s2 + $0x70] sm:$0xff]
        %v410 = vld [vmem:[%s2 + $0x78] sm:$0xff]
        %411 = vmatprep.subr.mxu0 0.0
        %412 = vmatpush1.msra.mxu0 %v410
        %413 = vmatprep.subr.mxu0 0.0
        %414 = vmatpush1.msra.mxu0 %v409
        %415 = vmatprep.subr.mxu0 0.0
        %416 = vmatpush1.msra.mxu0 %v408
        %417 = vmatprep.subr.mxu0 0.0
        %418 = vmatpush1.msra.mxu0 %v407
        %419 = vmatprep.subr.mxu0 0.0
        %420 = vmatpush1.msra.mxu0 %v406
        %421 = vmatprep.subr.mxu0 0.0
        %422 = vmatpush1.msra.mxu0 %v405
        %423 = vmatprep.subr.mxu0 0.0
        %424 = vmatpush1.msra.mxu0 %v404
        %425 = vmatprep.subr.mxu0 0.0
        %426 = vmatpush1.msra.mxu0 %v403
        %427 = vmatprep.subr.mxu0 0.0
        %428 = vmatpush1.msra.mxu0 %v402
        %429 = vmatprep.subr.mxu0 0.0
        %430 = vmatpush1.msra.mxu0 %v401
        %431 = vmatprep.subr.mxu0 0.0
        %432 = vmatpush1.msra.mxu0 %v400
        %433 = vmatprep.subr.mxu0 0.0
        %434 = vmatpush1.msra.mxu0 %v399
        %435 = vmatprep.subr.mxu0 0.0
        %436 = vmatpush1.msra.mxu0 %v398
        %437 = vmatprep.subr.mxu0 0.0
        %438 = vmatpush1.msra.mxu0 %v397
        %439 = vmatprep.subr.mxu0 0.0
        %440 = vmatpush1.msra.mxu0 %v396
        %441 = vmatprep.subr.mxu0 0.0
        %442 = vmatpush1.msra.mxu0 %v395
        %443 = vmatprep.subr.mxu0 0.0
        %444 = vmatpush2.msra.mxu0 0.0
        %445 = vmatprep.subr.mxu0 0.0
        %446 = vmatpush2.msra.mxu0 0.0
        %447 = vmatprep.subr.mxu0 0.0
        %448 = vmatpush2.msra.mxu0 0.0
        %449 = vmatprep.subr.mxu0 0.0
        %450 = vmatpush2.msra.mxu0 0.0
        %451 = vmatprep.subr.mxu0 0.0
        %452 = vmatpush2.msra.mxu0 0.0
        %453 = vmatprep.subr.mxu0 0.0
        %454 = vmatpush2.msra.mxu0 0.0
        %455 = vmatprep.subr.mxu0 0.0
        %456 = vmatpush2.msra.mxu0 0.0
        %457 = vmatprep.subr.mxu0 0.0
        %458 = vmatpush2.msra.mxu0 0.0
        %459 = vmatprep.subr.mxu0 0.0
        %460 = vmatpush2.msra.mxu0 0.0
        %461 = vmatprep.subr.mxu0 0.0
        %462 = vmatpush2.msra.mxu0 0.0
        %463 = vmatprep.subr.mxu0 0.0
        %464 = vmatpush2.msra.mxu0 0.0
        %465 = vmatprep.subr.mxu0 0.0
        %466 = vmatpush2.msra.mxu0 0.0
        %467 = vmatprep.subr.mxu0 0.0
        %468 = vmatpush2.msra.mxu0 0.0
        %469 = vmatprep.subr.mxu0 0.0
        %470 = vmatpush2.msra.mxu0 0.0
        %471 = vmatprep.subr.mxu0 0.0
        %472 = vmatpush2.msra.mxu0 0.0
        %473 = vmatprep.subr.mxu0 0.0
        %474 = vmatpush2.msra.mxu0 0.0
        %475 = vmatprep.mubr.f32.mxu0 0.0
        %476 = vmatmul.mubr.f32.gmra.mxu0 %v394
        %v477 = vpop.f32.mrf.mxu0
        %v478 = vadd.f32 0.0, %v477
        %v479 = vpop.f32.mrf.mxu0
        %480 = vdwg.mxu0
        %v481 = vsub.f32 0.0, %v478
        %482 = vst.msk [vmem:[%s277] sm:$0xff] %vm299, %v481
        %p483 = scmp.lt.s32.totalorder %s23, 2
        %s484 = scalar_select %p483, %s23, 2
        %s485 = smul.addr %s484, 8
        %s486 = scalar_lea.vmem %s6, %s485
        %s487 = sand.u32 %s188, 1
        %s488 = scalar_lea.sflag [#allocation4], %s487
        %s489 = sand.u32 %s188, 1
        %s490 = smul.addr %s489, 8
        %s491 = scalar_lea.vmem [#allocation3], %s490
        // Predicated region
        $region45: #{tpu_custom_call.1} parent=43 // pred_check
          %p492 = pneg %p172
        $region46: #{tpu_custom_call.1} parent=43 // pred_check_branch
          %494 = sbr.rel (%p492) target = $region48
        $region47: #{tpu_custom_call.1} parent=43 // pred_region
          _
        $region48: #{tpu_custom_call.1} parent=43 // pred_fallthru
          _
        // Predicated region
        $region49: #{tpu_custom_call.1} parent=43 // pred_check
          %p495 = pneg %p198
        $region50: #{tpu_custom_call.1} parent=43 // pred_check_branch
          %497 = sbr.rel (%p495) target = $region52
        $region51: #{tpu_custom_call.1} parent=43 // pred_region
          %s499 = ssub.s32 128, 128
          %500 = vsyncadd %s488, %s499
          %s501 = smul.addr %s23, 128
          %s502 = scalar_lea.hbm %s7, %s501
          %s504 = sshll.u32 %s491, 4
          %s505 = int_to_ptr.vmem [resolvable:$true] %s504
          %507 = dma.vmem_to_hbm [thread:$0]  %s505, 128, %s502, %s488
        $region52: #{tpu_custom_call.1} parent=43 // pred_fallthru
          _
      $region44: #{tpu_custom_call.1} parent=5 // pred_fallthru
        _
      %p508 = scmp.le.s32.totalorder 2, %s18
      // Predicated region
      $region53: #{tpu_custom_call.1} parent=5 // pred_check
        %p509 = pneg %p508
      $region54: #{tpu_custom_call.1} parent=5 // pred_check_branch
        %511 = sbr.rel (%p509) target = $region56
      $region55: #{tpu_custom_call.1} parent=5 // pred_region
        %s512 = ssub.s32 %s18, 2
        // Predicated region
        $region57: #{tpu_custom_call.1} parent=55 // pred_check
          %p513 = pneg %p178
        $region58: #{tpu_custom_call.1} parent=55 // pred_check_branch
          %515 = sbr.rel (%p513) target = $region60
        $region59: #{tpu_custom_call.1} parent=55 // pred_region
          %p516 = scmp.lt.s32.totalorder %s24, 2
          %s517 = scalar_select %p516, %s24, 2
          %s518 = smul.addr %s517, 8
          %s519 = scalar_lea.vmem %s6, %s518
        $region60: #{tpu_custom_call.1} parent=55 // pred_fallthru
          _
        // Predicated region
        $region61: #{tpu_custom_call.1} parent=55 // pred_check
          %p520 = pneg %p204
        $region62: #{tpu_custom_call.1} parent=55 // pred_check_branch
          %522 = sbr.rel (%p520) target = $region64
        $region63: #{tpu_custom_call.1} parent=55 // pred_region
          %s523 = sand.u32 %s189, 1
          %s524 = scalar_lea.sflag [#allocation4], %s523
          %s525 = sand.u32 %s189, 1
          %s526 = smul.addr %s525, 8
          %s527 = scalar_lea.vmem [#allocation3], %s526
          %528 = dma.done %s524, 128
        $region64: #{tpu_custom_call.1} parent=55 // pred_fallthru
          _
      $region56: #{tpu_custom_call.1} parent=5 // pred_fallthru
        _
    $region6: #{tpu_custom_call.1} parent=1 // loop_footer
      %s22 = sadd.s32 1, %s18
    $region7: #{tpu_custom_call.1} parent=1 // loop_footer_branch
      %17 = sbr.rel target = $region3
    $region8: #{tpu_custom_call.1} parent=1 // loop_exit
      _
    %529 = vsyncpa [#allocation4], 1
    %s530 = scalar_lea.sflag [#allocation4], 1
    %531 = vsyncpa %s530, 1

</llo_original>
